<compile_context>
chip_gen: v7x
topology: tpu7x:2x2x1
jax: 0.10.0
libtpu: 0.0.40
codegen_flags: <defaults>
</compile_context>

<pallas_src>
import jax
import jax.numpy as jnp
from jax.experimental import pallas as pl
from jax.experimental.pallas import tpu as pltpu


def _round_up(x, m):
    return (x + m - 1) // m * m


def _make_mlp_ce_kernel(batch, num_classes):
    """Fused (Linear -> Linear) + cross-entropy over one batch tile."""

    def kernel(x_ref, w1_ref, b1_ref, w2_ref, b2_ref, labels_ref,
               logits_ref, loss_part_ref):
        x = x_ref[...]                                             # (TM, D_in)

        # ---- Linear 1: x @ W1 (already (D_in, H_pad)) + b1 ------------------
        h = jnp.dot(x, w1_ref[...], preferred_element_type=jnp.float32)
        h = h + b1_ref[...]                                        # (TM, H_pad)

        # ---- Linear 2: h @ W2 (already (H_pad, C_pad)) + b2 -----------------
        logits = jnp.dot(h, w2_ref[...], preferred_element_type=jnp.float32)
        logits = logits + b2_ref[...]                              # (TM, C_pad)
        logits_ref[...] = logits.astype(logits_ref.dtype)

        # ---- CrossEntropy partial (class-index targets) ---------------------
        tm, c_pad = logits.shape
        col_ids = jax.lax.broadcasted_iota(jnp.int32, (tm, c_pad), 1)

        # Padded (zero-weight) class columns must not enter the softmax.
        masked = jnp.where(col_ids < num_classes, logits, -1e30)
        m = jnp.max(masked, axis=-1, keepdims=True)                # (TM, 1)
        lse = m + jnp.log(
            jnp.sum(jnp.exp(masked - m), axis=-1, keepdims=True))  # (TM, 1)

        labels = labels_ref[...]                                   # (TM, 1) i32
        onehot = (col_ids == labels).astype(logits.dtype)          # (TM, C_pad)
        picked = jnp.sum(logits * onehot, axis=-1, keepdims=True)  # (TM, 1)

        # Mask padded batch rows of this tile out of the loss.
        row_ids = (pl.program_id(0) * tm
                   + jax.lax.broadcasted_iota(jnp.int32, (tm, 1), 0))
        per_row = jnp.where(row_ids < batch, lse - picked, 0.0)

        # Per-tile partial sum -> SMEM scalar block (reduced to mean in JAX).
        loss_part_ref[0, 0] = jnp.sum(per_row)

    return kernel


def mlp_forward(embedding, labels, w1, b1, w2, b2, *, tile_m=256):
    """Fused MLP (two Linear layers) + CrossEntropyLoss via Pallas.

    embedding: (B, input_dim) float
    labels:    (B,) int class indices
    w1: (hidden, input)  b1: (hidden,)   [torch Linear layout]
    w2: (classes, hidden) b2: (classes,)
    Returns (logits (B, classes) f32, scalar loss f32).
    """
    B, D_in = embedding.shape
    H = w1.shape[0]
    C = w2.shape[0]
    f32 = jnp.float32

    # Lane-align hidden / class dims and pre-transpose weights to (in, out).
    H_pad = _round_up(H, 128)
    C_pad = _round_up(C, 128)
    w1_t = jnp.zeros((D_in, H_pad), f32).at[:, :H].set(w1.T.astype(f32))
    b1_p = jnp.zeros((1, H_pad), f32).at[:, :H].set(b1.astype(f32))
    w2_t = jnp.zeros((H_pad, C_pad), f32).at[:H, :C].set(w2.T.astype(f32))
    b2_p = jnp.zeros((1, C_pad), f32).at[:, :C].set(b2.astype(f32))

    # Batch tiling: pad B to a multiple of the tile so the grid covers it.
    tm = min(tile_m, _round_up(B, 8))
    B_pad = _round_up(B, tm)
    num_tiles = B_pad // tm
    x_p = jnp.zeros((B_pad, D_in), f32).at[:B].set(embedding.astype(f32))
    lbl_p = jnp.zeros((B_pad, 1), jnp.int32).at[:B, 0].set(
        labels.astype(jnp.int32))

    kernel = _make_mlp_ce_kernel(B, C)

    flops = 2 * B_pad * (D_in * H_pad + H_pad * C_pad)
    bytes_accessed = 4 * (x_p.size + w1_t.size + b1_p.size + w2_t.size
                          + b2_p.size + lbl_p.size + B_pad * C_pad + num_tiles)
    cost = pl.CostEstimate(flops=flops,
                           transcendentals=B_pad * C_pad,
                           bytes_accessed=bytes_accessed)

    logits_pad, loss_parts = pl.pallas_call(
        kernel,
        out_shape=(
            jax.ShapeDtypeStruct((B_pad, C_pad), jnp.float32),
            jax.ShapeDtypeStruct((num_tiles, 1), jnp.float32),
        ),
        grid_spec=pltpu.PrefetchScalarGridSpec(
            num_scalar_prefetch=0,
            grid=(num_tiles,),
            in_specs=[
                pl.BlockSpec((tm, D_in), lambda i: (i, 0)),     # x tile
                pl.BlockSpec((D_in, H_pad), lambda i: (0, 0)),  # W1 (resident)
                pl.BlockSpec((1, H_pad), lambda i: (0, 0)),     # b1 (resident)
                pl.BlockSpec((H_pad, C_pad), lambda i: (0, 0)), # W2 (resident)
                pl.BlockSpec((1, C_pad), lambda i: (0, 0)),     # b2 (resident)
                pl.BlockSpec((tm, 1), lambda i: (i, 0)),        # labels tile
            ],
            out_specs=(
                pl.BlockSpec((tm, C_pad), lambda i: (i, 0)),    # logits tile
                pl.BlockSpec((1, 1), lambda i: (i, 0),          # loss partial
                             memory_space=pltpu.MemorySpace.SMEM),
            ),
        ),
        compiler_params=pltpu.CompilerParams(
            dimension_semantics=("parallel",)),
        cost_estimate=cost,
    )(x_p, w1_t, b1_p, w2_t, b2_p, lbl_p)

    logits = logits_pad[:B, :C]
    loss = jnp.sum(loss_parts) / B
    return logits, loss


if __name__ == "__main__":
    # Small shapes consistent with the module's forward.
    batch, input_dim, hidden_dim, output_dim = 8, 32, 64, 16

    key = jax.random.PRNGKey(0)
    k_x, k_w1, k_b1, k_w2, k_b2, k_lbl = jax.random.split(key, 6)

    # Deterministic parameter init (torch Linear-style uniform bounds).
    bound1 = 1.0 / float(input_dim) ** 0.5
    bound2 = 1.0 / float(hidden_dim) ** 0.5
    w1 = jax.random.uniform(k_w1, (hidden_dim, input_dim), jnp.float32,
                            -bound1, bound1)
    b1 = jax.random.uniform(k_b1, (hidden_dim,), jnp.float32, -bound1, bound1)
    w2 = jax.random.uniform(k_w2, (output_dim, hidden_dim), jnp.float32,
                            -bound2, bound2)
    b2 = jax.random.uniform(k_b2, (output_dim,), jnp.float32, -bound2, bound2)

    embedding = jax.random.normal(k_x, (batch, input_dim), jnp.float32)
    labels = jax.random.randint(k_lbl, (batch,), 0, output_dim, jnp.int32)

    logits, loss = mlp_forward(embedding, labels, w1, b1, w2, b2)
    jax.block_until_ready((logits, loss))

    # Pure-JAX reference check.
    ref_logits = (embedding @ w1.T + b1) @ w2.T + b2
    ref_lse = jax.scipy.special.logsumexp(ref_logits, axis=-1)
    ref_loss = jnp.mean(ref_lse - ref_logits[jnp.arange(batch), labels])
    assert jnp.allclose(logits, ref_logits, atol=1e-4, rtol=1e-4)
    assert jnp.allclose(loss, ref_loss, atol=1e-4, rtol=1e-4)

    print("KERNEL_OK")
</pallas_src>

<mosaic_0001>
module attributes {stable_mosaic.version = 11 : i64} {
  func.func @kernel(%arg0: i32, %arg1: memref<8x32xf32, #tpu.memory_space<vmem>>, %arg2: memref<32x128xf32, #tpu.memory_space<vmem>>, %arg3: memref<1x128xf32, #tpu.memory_space<vmem>>, %arg4: memref<128x128xf32, #tpu.memory_space<vmem>>, %arg5: memref<1x128xf32, #tpu.memory_space<vmem>>, %arg6: memref<8x1xi32, #tpu.memory_space<vmem>>, %arg7: memref<8x128xf32, #tpu.memory_space<vmem>>, %arg8: memref<1x1xf32, #tpu.memory_space<smem>>) attributes {dimension_semantics = [#tpu.dimension_semantics<parallel>], iteration_bounds = array<i64: 1>, scalar_prefetch = 0 : i64, scratch_operands = 0 : i64, tpu.core_type = #tpu.core_type<tc>, window_params = [{transform_indices = @transform_0, window_bounds = array<i64: 8, 32>}, {pipeline_mode = #tpu.pipeline_mode<synchronous>, transform_indices = @transform_1, window_bounds = array<i64: 32, 128>}, {pipeline_mode = #tpu.pipeline_mode<synchronous>, transform_indices = @transform_2, window_bounds = array<i64: 1, 128>}, {pipeline_mode = #tpu.pipeline_mode<synchronous>, transform_indices = @transform_3, window_bounds = array<i64: 128, 128>}, {pipeline_mode = #tpu.pipeline_mode<synchronous>, transform_indices = @transform_4, window_bounds = array<i64: 1, 128>}, {transform_indices = @transform_5, window_bounds = array<i64: 8, 1>}, {transform_indices = @transform_6, window_bounds = array<i64: 8, 128>}, {transform_indices = @transform_7, window_bounds = array<i64: 1, 1>}]} {
    %c0 = arith.constant 0 : index
    %c0_0 = arith.constant 0 : index
    %0 = vector.load %arg1[%c0, %c0_0] : memref<8x32xf32, #tpu.memory_space<vmem>>, vector<8x32xf32>
    %c0_1 = arith.constant 0 : index
    %c0_2 = arith.constant 0 : index
    %1 = vector.load %arg2[%c0_1, %c0_2] : memref<32x128xf32, #tpu.memory_space<vmem>>, vector<32x128xf32>
    %cst = arith.constant dense<0.000000e+00> : vector<8x128xf32>
    %2 = tpu.matmul %0, %1, %cst {dimension_numbers = #tpu.dot_dimension_numbers<[1], [0], [0], [1], [0, 0, 1, 1], [], []>} : vector<8x32xf32>, vector<32x128xf32>, vector<8x128xf32> -> vector<8x128xf32>
    %c0_3 = arith.constant 0 : index
    %c0_4 = arith.constant 0 : index
    %3 = vector.load %arg3[%c0_3, %c0_4] : memref<1x128xf32, #tpu.memory_space<vmem>>, vector<1x128xf32>
    %4 = vector.broadcast %3 : vector<1x128xf32> to vector<8x128xf32>
    %5 = arith.addf %2, %4 : vector<8x128xf32>
    %c0_5 = arith.constant 0 : index
    %c0_6 = arith.constant 0 : index
    %6 = vector.load %arg4[%c0_5, %c0_6] : memref<128x128xf32, #tpu.memory_space<vmem>>, vector<128x128xf32>
    %cst_7 = arith.constant dense<0.000000e+00> : vector<8x128xf32>
    %7 = tpu.matmul %5, %6, %cst_7 {dimension_numbers = #tpu.dot_dimension_numbers<[1], [0], [0], [1], [0, 0, 1, 1], [], []>} : vector<8x128xf32>, vector<128x128xf32>, vector<8x128xf32> -> vector<8x128xf32>
    %c0_8 = arith.constant 0 : index
    %c0_9 = arith.constant 0 : index
    %8 = vector.load %arg5[%c0_8, %c0_9] : memref<1x128xf32, #tpu.memory_space<vmem>>, vector<1x128xf32>
    %9 = vector.broadcast %8 : vector<1x128xf32> to vector<8x128xf32>
    %10 = arith.addf %7, %9 : vector<8x128xf32>
    %c0_10 = arith.constant 0 : index
    %c0_11 = arith.constant 0 : index
    %11 = vector.load %arg7[%c0_10, %c0_11] : memref<8x128xf32, #tpu.memory_space<vmem>>, vector<8x128xf32>
    tpu.vector_store %arg7[%c0_10, %c0_11], %10 {strides = array<i32>} : memref<8x128xf32, #tpu.memory_space<vmem>>, vector<8x128xf32>,
    %12 = tpu.iota {dimensions = array<i32: 1>} : vector<8x128xi32>
    %c16_i32 = arith.constant 16 : i32
    %13 = vector.broadcast %c16_i32 : i32 to vector<8x128xi32>
    %14 = arith.cmpi slt, %12, %13 : vector<8x128xi32>
    %cst_12 = arith.constant -1.000000e+30 : f32
    %15 = vector.broadcast %cst_12 : f32 to vector<8x128xf32>
    %16 = arith.select %14, %10, %15 : vector<8x128xi1>, vector<8x128xf32>
    %cst_13 = arith.constant dense<0xFF800000> : vector<8xf32>
    %17 = vector.multi_reduction <maximumf>, %16, %cst_13 [1] : vector<8x128xf32> to vector<8xf32>
    %18 = vector.shape_cast %17 : vector<8xf32> to vector<8x1xf32>
    %19 = vector.broadcast %18 : vector<8x1xf32> to vector<8x128xf32>
    %20 = arith.subf %16, %19 : vector<8x128xf32>
    %21 = math.exp %20 : vector<8x128xf32>
    %cst_14 = arith.constant dense<0.000000e+00> : vector<8xf32>
    %22 = vector.multi_reduction <add>, %21, %cst_14 [1] : vector<8x128xf32> to vector<8xf32>
    %23 = vector.shape_cast %22 : vector<8xf32> to vector<8x1xf32>
    %24 = math.log %23 : vector<8x1xf32>
    %25 = arith.addf %18, %24 : vector<8x1xf32>
    %c0_15 = arith.constant 0 : index
    %c0_16 = arith.constant 0 : index
    %26 = vector.load %arg6[%c0_15, %c0_16] : memref<8x1xi32, #tpu.memory_space<vmem>>, vector<8x1xi32>
    %27 = vector.broadcast %26 : vector<8x1xi32> to vector<8x128xi32>
    %28 = arith.cmpi eq, %12, %27 : vector<8x128xi32>
    %29 = arith.extui %28 : vector<8x128xi1> to vector<8x128xi32>
    %30 = arith.sitofp %29 : vector<8x128xi32> to vector<8x128xf32>
    %31 = arith.mulf %10, %30 : vector<8x128xf32>
    %cst_17 = arith.constant dense<0.000000e+00> : vector<8xf32>
    %32 = vector.multi_reduction <add>, %31, %cst_17 [1] : vector<8x128xf32> to vector<8xf32>
    %33 = vector.shape_cast %32 : vector<8xf32> to vector<8x1xf32>
    %c8_i32 = arith.constant 8 : i32
    %34 = arith.muli %arg0, %c8_i32 : i32
    %35 = tpu.iota {dimensions = array<i32: 0>} : vector<8x1xi32>
    %36 = vector.broadcast %34 : i32 to vector<8x1xi32>
    %37 = arith.addi %36, %35 : vector<8x1xi32>
    %c8_i32_18 = arith.constant 8 : i32
    %38 = vector.broadcast %c8_i32_18 : i32 to vector<8x1xi32>
    %39 = arith.cmpi slt, %37, %38 : vector<8x1xi32>
    %40 = arith.subf %25, %33 : vector<8x1xf32>
    %cst_19 = arith.constant 0.000000e+00 : f32
    %41 = vector.broadcast %cst_19 : f32 to vector<8x1xf32>
    %42 = arith.select %39, %40, %41 : vector<8x1xi1>, vector<8x1xf32>
    %43 = vector.shape_cast %42 : vector<8x1xf32> to vector<1x8x1xf32>
    %cst_20 = arith.constant dense<0.000000e+00> : vector<1xf32>
    %44 = vector.multi_reduction <add>, %43, %cst_20 [1, 2] : vector<1x8x1xf32> to vector<1xf32>
    %45 = vector.shape_cast %44 : vector<1xf32> to vector<1x1x1xf32>
    %46 = vector.extract %45[0, 0, 0] : f32 from vector<1x1x1xf32>
    %c0_21 = arith.constant 0 : index
    %c0_22 = arith.constant 0 : index
    %47 = memref.load %arg8[%c0_21, %c0_22] : memref<1x1xf32, #tpu.memory_space<smem>>
    memref.store %46, %arg8[%c0_21, %c0_22] : memref<1x1xf32, #tpu.memory_space<smem>>
    return
  }
  func.func @transform_0(%arg0: i32) -> (i32, i32) {
    %c0_i32 = arith.constant 0 : i32
    %c0_i32_0 = arith.constant 0 : i32
    return %arg0, %c0_i32 : i32, i32
  }
  func.func @transform_1(%arg0: i32) -> (i32, i32) {
    %c0_i32 = arith.constant 0 : i32
    %c0_i32_0 = arith.constant 0 : i32
    %c0_i32_1 = arith.constant 0 : i32
    return %c0_i32, %c0_i32_0 : i32, i32
  }
  func.func @transform_2(%arg0: i32) -> (i32, i32) {
    %c0_i32 = arith.constant 0 : i32
    %c0_i32_0 = arith.constant 0 : i32
    %c0_i32_1 = arith.constant 0 : i32
    return %c0_i32, %c0_i32_0 : i32, i32
  }
  func.func @transform_3(%arg0: i32) -> (i32, i32) {
    %c0_i32 = arith.constant 0 : i32
    %c0_i32_0 = arith.constant 0 : i32
    %c0_i32_1 = arith.constant 0 : i32
    return %c0_i32, %c0_i32_0 : i32, i32
  }
  func.func @transform_4(%arg0: i32) -> (i32, i32) {
    %c0_i32 = arith.constant 0 : i32
    %c0_i32_0 = arith.constant 0 : i32
    %c0_i32_1 = arith.constant 0 : i32
    return %c0_i32, %c0_i32_0 : i32, i32
  }
  func.func @transform_5(%arg0: i32) -> (i32, i32) {
    %c0_i32 = arith.constant 0 : i32
    %c0_i32_0 = arith.constant 0 : i32
    return %arg0, %c0_i32 : i32, i32
  }
  func.func @transform_6(%arg0: i32) -> (i32, i32) {
    %c0_i32 = arith.constant 0 : i32
    %c0_i32_0 = arith.constant 0 : i32
    return %arg0, %c0_i32 : i32, i32
  }
  func.func @transform_7(%arg0: i32) -> (i32, i32) {
    %c0_i32 = arith.constant 0 : i32
    %c0_i32_0 = arith.constant 0 : i32
    return %arg0, %c0_i32 : i32, i32
  }
}

</mosaic_0001>

<llo_original>
// kernel: tpu_custom_call.1
$region0: #{tpu_custom_call.1}
  #allocation0 [shape = 'u32[]', space=smem, size = 0x4, offset = 0x4, fixed_abs, tag = 'smem constant byte address 0x4 - core index']
  #allocation1 [shape = 'u32[144,128]{1,0:T(1,128)}', space=vmem, size = 0x12000, scoped, tag = 'internal scratch']
  %s0 = inlined_call_operand.vmem [shape: f32[8,32], index: 0, kind: input, shape index: {}]
  %s1 = inlined_call_operand.hbm [shape: f32[32,128], index: 1, kind: input, shape index: {}]
  %s2 = inlined_call_operand.vmem [shape: f32[1,128], index: 2, kind: input, shape index: {}]
  %s3 = inlined_call_operand.hbm [shape: f32[128,128], index: 3, kind: input, shape index: {}]
  %s4 = inlined_call_operand.vmem [shape: f32[1,128], index: 4, kind: input, shape index: {}]
  %s5 = inlined_call_operand.vmem [shape: s32[8,1], index: 5, kind: input, shape index: {}]
  %s6 = inlined_call_operand.hbm [shape: f32[8,128], index: 6, kind: output, shape index: {0}]
  %s7 = inlined_call_operand.hbm [shape: f32[1,1], index: 7, kind: output, shape index: {1}]
  %8 = xla_tuple %s6, %s7
  %s9 = sld [smem:[#allocation0]]
  $region50: #{tpu_custom_call.1} parent=0
    _
  %s11 = ssub.s32 1, %s9
  %s12 = scalar_select 0, %s11, %s9
  $region1: #{tpu_custom_call.1} parent=0
    #allocation2 [shape = 'u8[16384]{0}', space=vmem, size = 0x4000, scoped, tag = 'input window, operand 1, single buffered']
    #allocation3 [shape = 's32[1]{0}', space=sflag, size = 0x4, scoped, tag = 'scoped memory for tpu_custom_call.1']
    #allocation4 [shape = 's32[1]{0}', space=sflag, size = 0x4, scoped, tag = 'scoped memory for tpu_custom_call.1']
    #allocation5 [shape = 's32[1]{0}', space=sflag, size = 0x4, scoped, tag = 'scoped memory for tpu_custom_call.1']
    #allocation6 [shape = 'u8[65536]{0}', space=vmem, size = 0x10000, scoped, tag = 'input window, operand 3, single buffered']
    #allocation7 [shape = 's32[1]{0}', space=sflag, size = 0x4, scoped, tag = 'scoped memory for tpu_custom_call.1']
    #allocation8 [shape = 'u8[4096]{0}', space=vmem, size = 0x1000, scoped, tag = 'output window, operand 0, single buffered']
    #allocation9 [shape = 'u8[512]{0}', space=smem, size = 0x200, scoped, tag = 'output window, operand 1, single buffered']
    %13 = vsyncpa [#allocation3], 0
    %14 = vsyncpa [#allocation7], 0
    %15 = vsyncpa [#allocation4], 0
    %16 = vsyncpa [#allocation5], 0
    // Predicated region
    $region2: #{tpu_custom_call.1} parent=1 // pred_check
      _
    $region3: #{tpu_custom_call.1} parent=1 // pred_check_branch
      %18 = sbr.rel (0) target = $region5
    $region4: #{tpu_custom_call.1} parent=1 // pred_region
      _
    $region5: #{tpu_custom_call.1} parent=1 // pred_fallthru
      _
    // Predicated region
    $region6: #{tpu_custom_call.1} parent=1 // pred_check
      _
    $region7: #{tpu_custom_call.1} parent=1 // pred_check_branch
      %20 = sbr.rel (0) target = $region9
    $region8: #{tpu_custom_call.1} parent=1 // pred_region
      %s22 = ssub.s32 512, 512
      %23 = vsyncadd [#allocation3], %s22
      %s24 = sshll.u32 [#allocation2], 4
      %s25 = int_to_ptr.vmem [resolvable:$true] %s24
      %30 = dma.hbm_to_vmem [thread:$0]  %s1, 512, %s25, [#allocation3], 128, 128, 8
    $region9: #{tpu_custom_call.1} parent=1 // pred_fallthru
      _
    // Predicated region
    $region10: #{tpu_custom_call.1} parent=1 // pred_check
      _
    $region11: #{tpu_custom_call.1} parent=1 // pred_check_branch
      %32 = sbr.rel (0) target = $region13
    $region12: #{tpu_custom_call.1} parent=1 // pred_region
      _
    $region13: #{tpu_custom_call.1} parent=1 // pred_fallthru
      _
    // Predicated region
    $region14: #{tpu_custom_call.1} parent=1 // pred_check
      _
    $region15: #{tpu_custom_call.1} parent=1 // pred_check_branch
      %34 = sbr.rel (0) target = $region17
    $region16: #{tpu_custom_call.1} parent=1 // pred_region
      %s36 = ssub.s32 2048, 2048
      %37 = vsyncadd [#allocation7], %s36
      %s38 = sshll.u32 [#allocation6], 4
      %s39 = int_to_ptr.vmem [resolvable:$true] %s38
      %44 = dma.hbm_to_vmem [thread:$0]  %s3, 2048, %s39, [#allocation7], 128, 128, 8
    $region17: #{tpu_custom_call.1} parent=1 // pred_fallthru
      _
    // Predicated region
    $region18: #{tpu_custom_call.1} parent=1 // pred_check
      _
    $region19: #{tpu_custom_call.1} parent=1 // pred_check_branch
      %46 = sbr.rel (0) target = $region21
    $region20: #{tpu_custom_call.1} parent=1 // pred_region
      _
    $region21: #{tpu_custom_call.1} parent=1 // pred_fallthru
      _
    // Predicated region
    $region22: #{tpu_custom_call.1} parent=1 // pred_check
      _
    $region23: #{tpu_custom_call.1} parent=1 // pred_check_branch
      %48 = sbr.rel (0) target = $region25
    $region24: #{tpu_custom_call.1} parent=1 // pred_region
      _
    $region25: #{tpu_custom_call.1} parent=1 // pred_fallthru
      _
    // Predicated region
    $region26: #{tpu_custom_call.1} parent=1 // pred_check
      _
    $region27: #{tpu_custom_call.1} parent=1 // pred_check_branch
      %50 = sbr.rel (0) target = $region29
    $region28: #{tpu_custom_call.1} parent=1 // pred_region
      %51 = dma.done [#allocation3], 512
    $region29: #{tpu_custom_call.1} parent=1 // pred_fallthru
      _
    // Predicated region
    $region30: #{tpu_custom_call.1} parent=1 // pred_check
      _
    $region31: #{tpu_custom_call.1} parent=1 // pred_check_branch
      %53 = sbr.rel (0) target = $region33
    $region32: #{tpu_custom_call.1} parent=1 // pred_region
      %54 = dma.done [#allocation7], 2048
    $region33: #{tpu_custom_call.1} parent=1 // pred_fallthru
      _
    %v55 = vld [vmem:[%s0] sm:$0xff]
    %v56 = vld [vmem:[#allocation2] sm:$0xff]
    %v57 = vld [vmem:[#allocation2 + $0x8] sm:$0xff]
    %v58 = vld [vmem:[#allocation2 + $0x10] sm:$0xff]
    %v59 = vld [vmem:[#allocation2 + $0x18] sm:$0xff]
    %v60 = vld [vmem:[%s2] sm:$0x1]
    %v62 = vlaneseq
    %v63 = vshrl.u32 %v62, 7
    %v64 = vsub.s32 0, %v63
    %v65 = vrot.slane %v60, %v64
    %vm67 = vcmask 261120
    %v69 = vsel %vm67, %v55, 0
    %71 = vmatprep.subr.mxu0 0.0
    %72 = vmatpush1.msra.mxu0 %v56
    %73 = vmatprep.subr.mxu0 0.0
    %74 = vmatpush1.msra.mxu0 %v57
    %75 = vmatprep.subr.mxu0 0.0
    %76 = vmatpush1.msra.mxu0 %v58
    %77 = vmatprep.subr.mxu0 0.0
    %78 = vmatpush1.msra.mxu0 %v59
    %79 = vmatprep.subr.mxu0 0.0
    %80 = vmatpush1.msra.mxu0 0.0
    %81 = vmatprep.subr.mxu0 0.0
    %82 = vmatpush1.msra.mxu0 0.0
    %83 = vmatprep.subr.mxu0 0.0
    %84 = vmatpush1.msra.mxu0 0.0
    %85 = vmatprep.subr.mxu0 0.0
    %86 = vmatpush1.msra.mxu0 0.0
    %87 = vmatprep.subr.mxu0 0.0
    %88 = vmatpush1.msra.mxu0 0.0
    %89 = vmatprep.subr.mxu0 0.0
    %90 = vmatpush1.msra.mxu0 0.0
    %91 = vmatprep.subr.mxu0 0.0
    %92 = vmatpush1.msra.mxu0 0.0
    %93 = vmatprep.subr.mxu0 0.0
    %94 = vmatpush1.msra.mxu0 0.0
    %95 = vmatprep.subr.mxu0 0.0
    %96 = vmatpush1.msra.mxu0 0.0
    %97 = vmatprep.subr.mxu0 0.0
    %98 = vmatpush1.msra.mxu0 0.0
    %99 = vmatprep.subr.mxu0 0.0
    %100 = vmatpush1.msra.mxu0 0.0
    %101 = vmatprep.subr.mxu0 0.0
    %102 = vmatpush1.msra.mxu0 0.0
    %103 = vmatprep.subr.mxu0 0.0
    %104 = vmatpush1.msra.mxu0 0.0
    %105 = vmatprep.subr.mxu0 0.0
    %106 = vmatpush1.msra.mxu0 0.0
    %107 = vmatprep.subr.mxu0 0.0
    %108 = vmatpush1.msra.mxu0 0.0
    %109 = vmatprep.subr.mxu0 0.0
    %110 = vmatpush1.msra.mxu0 0.0
    %111 = vmatprep.subr.mxu0 0.0
    %112 = vmatpush1.msra.mxu0 0.0
    %113 = vmatprep.subr.mxu0 0.0
    %114 = vmatpush1.msra.mxu0 0.0
    %115 = vmatprep.subr.mxu0 0.0
    %116 = vmatpush1.msra.mxu0 0.0
    %117 = vmatprep.subr.mxu0 0.0
    %118 = vmatpush1.msra.mxu0 0.0
    %119 = vmatprep.subr.mxu0 0.0
    %120 = vmatpush1.msra.mxu0 0.0
    %121 = vmatprep.subr.mxu0 0.0
    %122 = vmatpush1.msra.mxu0 0.0
    %123 = vmatprep.subr.mxu0 0.0
    %124 = vmatpush1.msra.mxu0 0.0
    %125 = vmatprep.subr.mxu0 0.0
    %126 = vmatpush1.msra.mxu0 0.0
    %127 = vmatprep.subr.mxu0 0.0
    %128 = vmatpush1.msra.mxu0 0.0
    %129 = vmatprep.subr.mxu0 0.0
    %130 = vmatpush1.msra.mxu0 0.0
    %131 = vmatprep.subr.mxu0 0.0
    %132 = vmatpush1.msra.mxu0 0.0
    %133 = vmatprep.subr.mxu0 0.0
    %134 = vmatpush1.msra.mxu0 0.0
    %135 = vmatprep.mubr.f32.mxu0 0.0
    %136 = vmatmul.mubr.f32.gmra.mrb[0].mxu0 %v69
    %v137 = vpop.f32.mrb[0].mxu0
    %v138 = vadd.f32 %v65, %v137
    %v139 = vpop.f32.mrb[0].mxu0
    %140 = vdwg.mxu0
    %v141 = vld [vmem:[#allocation6] sm:$0xff]
    %v142 = vld [vmem:[#allocation6 + $0x8] sm:$0xff]
    %v143 = vld [vmem:[#allocation6 + $0x10] sm:$0xff]
    %v144 = vld [vmem:[#allocation6 + $0x18] sm:$0xff]
    %v145 = vld [vmem:[#allocation6 + $0x20] sm:$0xff]
    %v146 = vld [vmem:[#allocation6 + $0x28] sm:$0xff]
    %v147 = vld [vmem:[#allocation6 + $0x30] sm:$0xff]
    %v148 = vld [vmem:[#allocation6 + $0x38] sm:$0xff]
    %v149 = vld [vmem:[#allocation6 + $0x40] sm:$0xff]
    %v150 = vld [vmem:[#allocation6 + $0x48] sm:$0xff]
    %v151 = vld [vmem:[#allocation6 + $0x50] sm:$0xff]
    %v152 = vld [vmem:[#allocation6 + $0x58] sm:$0xff]
    %v153 = vld [vmem:[#allocation6 + $0x60] sm:$0xff]
    %v154 = vld [vmem:[#allocation6 + $0x68] sm:$0xff]
    %v155 = vld [vmem:[#allocation6 + $0x70] sm:$0xff]
    %v156 = vld [vmem:[#allocation6 + $0x78] sm:$0xff]
    %v157 = vld [vmem:[%s4] sm:$0x1]
    %v159 = vlaneseq
    %v160 = vshrl.u32 %v159, 7
    %v161 = vsub.s32 0, %v160
    %v162 = vrot.slane %v157, %v161
    %164 = vmatprep.subr.mxu0 0.0
    %165 = vmatpush1.msra.mxu0 %v141
    %166 = vmatprep.subr.mxu0 0.0
    %167 = vmatpush1.msra.mxu0 %v142
    %168 = vmatprep.subr.mxu0 0.0
    %169 = vmatpush1.msra.mxu0 %v143
    %170 = vmatprep.subr.mxu0 0.0
    %171 = vmatpush1.msra.mxu0 %v144
    %172 = vmatprep.subr.mxu0 0.0
    %173 = vmatpush1.msra.mxu0 %v145
    %174 = vmatprep.subr.mxu0 0.0
    %175 = vmatpush1.msra.mxu0 %v146
    %176 = vmatprep.subr.mxu0 0.0
    %177 = vmatpush1.msra.mxu0 %v147
    %178 = vmatprep.subr.mxu0 0.0
    %179 = vmatpush1.msra.mxu0 %v148
    %180 = vmatprep.subr.mxu0 0.0
    %181 = vmatpush1.msra.mxu0 %v149
    %182 = vmatprep.subr.mxu0 0.0
    %183 = vmatpush1.msra.mxu0 %v150
    %184 = vmatprep.subr.mxu0 0.0
    %185 = vmatpush1.msra.mxu0 %v151
    %186 = vmatprep.subr.mxu0 0.0
    %187 = vmatpush1.msra.mxu0 %v152
    %188 = vmatprep.subr.mxu0 0.0
    %189 = vmatpush1.msra.mxu0 %v153
    %190 = vmatprep.subr.mxu0 0.0
    %191 = vmatpush1.msra.mxu0 %v154
    %192 = vmatprep.subr.mxu0 0.0
    %193 = vmatpush1.msra.mxu0 %v155
    %194 = vmatprep.subr.mxu0 0.0
    %195 = vmatpush1.msra.mxu0 %v156
    %196 = vmatprep.subr.mxu0 0.0
    %197 = vmatpush1.msra.mxu0 0.0
    %198 = vmatprep.subr.mxu0 0.0
    %199 = vmatpush1.msra.mxu0 0.0
    %200 = vmatprep.subr.mxu0 0.0
    %201 = vmatpush1.msra.mxu0 0.0
    %202 = vmatprep.subr.mxu0 0.0
    %203 = vmatpush1.msra.mxu0 0.0
    %204 = vmatprep.subr.mxu0 0.0
    %205 = vmatpush1.msra.mxu0 0.0
    %206 = vmatprep.subr.mxu0 0.0
    %207 = vmatpush1.msra.mxu0 0.0
    %208 = vmatprep.subr.mxu0 0.0
    %209 = vmatpush1.msra.mxu0 0.0
    %210 = vmatprep.subr.mxu0 0.0
    %211 = vmatpush1.msra.mxu0 0.0
    %212 = vmatprep.subr.mxu0 0.0
    %213 = vmatpush1.msra.mxu0 0.0
    %214 = vmatprep.subr.mxu0 0.0
    %215 = vmatpush1.msra.mxu0 0.0
    %216 = vmatprep.subr.mxu0 0.0
    %217 = vmatpush1.msra.mxu0 0.0
    %218 = vmatprep.subr.mxu0 0.0
    %219 = vmatpush1.msra.mxu0 0.0
    %220 = vmatprep.subr.mxu0 0.0
    %221 = vmatpush1.msra.mxu0 0.0
    %222 = vmatprep.subr.mxu0 0.0
    %223 = vmatpush1.msra.mxu0 0.0
    %224 = vmatprep.subr.mxu0 0.0
    %225 = vmatpush1.msra.mxu0 0.0
    %226 = vmatprep.subr.mxu0 0.0
    %227 = vmatpush1.msra.mxu0 0.0
    %228 = vmatprep.mubr.f32.mxu0 0.0
    %229 = vmatmul.mubr.f32.gmra.mrb[0].mxu0 %v138
    %v230 = vpop.f32.mrb[0].mxu0
    %v231 = vadd.f32 %v162, %v230
    %v232 = vpop.f32.mrb[0].mxu0
    %233 = vdwg.mxu0
    %234 = vst [vmem:[#allocation8] sm:$0xff] %v231
    %v235 = vlaneseq
    %v236 = vand.u32 %v235, 127
    %vm237 = vcmp.lt.s32.totalorder %v236, 16
    %v238 = vsel %vm237, %v231, -1e+30
    %239 = vmax.xlane.f32.xlu0 %v238
    %v240 = vpop.xlane.xlu0 %239
    %v241 = vsub.f32 %v238, %v240
    %v242 = vmul.f32 %v241, 1.442695
    %v243 = vpow.pop %v242
    %244 = vadd.xlane.f32.xlu0 %v243
    %v245 = vpop.xlane.xlu0 %244
    %v246 = vlog2.pop %v245
    %v247 = vmul.f32 %v246, 0.6931472
    %v248 = vadd.f32 %v240, %v247
    %v249 = vld [vmem:[%s5] sm:$0xff]
    %250 = vset.pattern.permute.xlu0 0
    %251 = vperm.xlu0 %250, %v249
    %v252 = vpop.permute.xlu0 %251
    %vm253 = vcmp.eq.s32.totalorder %v236, %v252
    %v254 = vsel %vm253, 1, 0
    %v255 = vcvt.s32.f32 %v254
    %v256 = vmul.f32 %v231, %v255
    %257 = vadd.xlane.f32.xlu0 %v256
    %v258 = vpop.xlane.xlu0 %257
    %s259 = smul.u32 0, 8
    %v260 = vlaneseq
    %v261 = vshrl.u32 %v260, 7
    %v262 = vstv %s259
    %v263 = vadd.s32 %v262, %v261
    %vm264 = vcmp.lt.s32.totalorder %v263, 8
    %v265 = vsub.f32 %v248, %v258
    %v266 = vsel %vm264, %v265, 0.0
    %vm267 = vcmask 7168
    %v268 = vsel %vm267, %v266, 0.0
    %269 = vadd.xlane.f32.xlu0 %v268
    %v270 = vpop.xlane.xlu0 %269
    %v271 = vrot.slane %v270, 4
    %v272 = vadd.f32 %v270, %v271
    %v273 = vrot.slane %v272, 2
    %v274 = vadd.f32 %v272, %v273
    %v275 = vrot.slane %v274, 1
    %v276 = vadd.f32 %v274, %v275
    %s277 = vtos %v276
    %s278 = scalar_lea.smem [#allocation9], 0
    %279 = sst [smem:[%s278]] %s277
    // Predicated region
    $region34: #{tpu_custom_call.1} parent=1 // pred_check
      _
    $region35: #{tpu_custom_call.1} parent=1 // pred_check_branch
      %281 = sbr.rel (0) target = $region37
    $region36: #{tpu_custom_call.1} parent=1 // pred_region
      %s283 = ssub.s32 128, 128
      %284 = vsyncadd [#allocation4], %s283
      %s286 = sshll.u32 [#allocation8], 4
      %s287 = int_to_ptr.vmem [resolvable:$true] %s286
      %289 = dma.vmem_to_hbm [thread:$0]  %s287, 128, %s6, [#allocation4]
    $region37: #{tpu_custom_call.1} parent=1 // pred_fallthru
      _
    // Predicated region
    $region38: #{tpu_custom_call.1} parent=1 // pred_check
      _
    $region39: #{tpu_custom_call.1} parent=1 // pred_check_branch
      %291 = sbr.rel (0) target = $region41
    $region40: #{tpu_custom_call.1} parent=1 // pred_region
      %s293 = ssub.s32 16, 16
      %294 = vsyncadd [#allocation5], %s293
      %297 = dma.smem_to_hbm [#allocation9], 16, %s7, [#allocation5]
    $region41: #{tpu_custom_call.1} parent=1 // pred_fallthru
      _
    // Predicated region
    $region42: #{tpu_custom_call.1} parent=1 // pred_check
      _
    $region43: #{tpu_custom_call.1} parent=1 // pred_check_branch
      %299 = sbr.rel (0) target = $region45
    $region44: #{tpu_custom_call.1} parent=1 // pred_region
      %300 = dma.done [#allocation4], 128
    $region45: #{tpu_custom_call.1} parent=1 // pred_fallthru
      _
    // Predicated region
    $region46: #{tpu_custom_call.1} parent=1 // pred_check
      _
    $region47: #{tpu_custom_call.1} parent=1 // pred_check_branch
      %302 = sbr.rel (0) target = $region49
    $region48: #{tpu_custom_call.1} parent=1 // pred_region
      %303 = dma.done [#allocation5], 16
    $region49: #{tpu_custom_call.1} parent=1 // pred_fallthru
      _
    %304 = sfence
    %305 = vsyncpa [#allocation3], 1
    %306 = vsyncpa [#allocation7], 1
    %307 = vsyncpa [#allocation4], 1
    %308 = vsyncpa [#allocation5], 1

</llo_original>
